<compile_context>
chip_gen: v5e
topology: v5e:2x2
jax: 0.10.0
libtpu: 0.0.40
codegen_flags: <defaults>
</compile_context>

<pallas_src>
import functools

import numpy as np
import jax
import jax.numpy as jnp
from jax.experimental import pallas as pl
from jax.experimental.pallas import tpu as pltpu


# ------------------------------------------------------------------ pass 1

def _in_stats_kernel(x_ref, mean_ref, rstd_ref, *, inv_p, eps):
    """InstanceNorm2d(affine=False) stats: accumulate per-(n, c) sum and
    sum-of-squares over spatial blocks (last grid axis = reduction), finalize
    mean / rstd on the last block.  Output blocks are resident accumulators."""
    t = pl.program_id(1)

    @pl.when(t == 0)
    def _():
        mean_ref[...] = jnp.zeros_like(mean_ref)
        rstd_ref[...] = jnp.zeros_like(rstd_ref)

    xb = x_ref[0]                                        # (rows_blk, C) f32
    mean_ref[0] += jnp.sum(xb, axis=0, keepdims=True)
    rstd_ref[0] += jnp.sum(xb * xb, axis=0, keepdims=True)

    @pl.when(t == pl.num_programs(1) - 1)
    def _():
        m = mean_ref[0] * inv_p
        # E[x^2] - E[x]^2: fine for activation-scale inputs (see review note).
        v = rstd_ref[0] * inv_p - m * m
        mean_ref[0] = m
        rstd_ref[0] = jax.lax.rsqrt(v + eps)


# ------------------------------------------------------------------ pass 2

def _spade_kernel(seg_ref, x_ref, mean_ref, rstd_ref, mcol_ref, ws_ref,
                  bs_ref, wgb_ref, bgb_ref, out_ref, actv_ref, *,
                  width, nhidden, chunks1, chunks2):
    """Fused SPADE tile for one (sample, row-tile).

    seg_ref : (1, 1, (TH+4)*W, 3*Cin) bf16  kw-folded, row-haloed segmap tile
    x_ref   : (1, TH*W, C) f32              input features tile
    mean/rstd : (1, 1, C) f32               InstanceNorm stats
    mcol_ref: (2, (TH+2)*W, NH) bf16        column masks for the w-1 / w+1 copies
    ws_ref  : (3, 3*Cin, NH) bf16           shared conv weights, kw folded into K
    bs_ref  : (1, NH) f32
    wgb_ref : (3, 3*NH, 2C) bf16            gamma|beta weights, kw folded into K
    bgb_ref : (1, 2C) f32
    actv_ref: VMEM scratch ((TH+2)*W, 3*NH) bf16  (kw-folded activations)
    """
    W = width
    NH = nhidden
    f32 = jnp.float32
    bf16 = jnp.bfloat16
    P1 = actv_ref.shape[0]                 # (TH+2)*W
    P0, C = out_ref.shape[1], out_ref.shape[2]

    zrow = jnp.zeros((1, NH), bf16)

    # ---- stage 1: actv = relu(conv3x3(seg) + b), stored kw-folded in bf16.
    # Sub-tiled so the f32 accumulator stays small (no spills); the 3 dots per
    # chunk form a clean accumulate chain (K = 3*Cin).
    for (m, cs) in chunks1:
        acc = jnp.zeros((cs, NH), f32)
        for khi in range(3):                           # kh = khi - 1
            s = m + khi * W                            # multiple of W -> aligned
            acc = acc + jnp.dot(seg_ref[0, 0, s:s + cs, :], ws_ref[khi],
                                preferred_element_type=f32)
        a16 = jnp.maximum(acc + bs_ref[...], 0.0).astype(bf16)
        # Build the (w-1) / (w+1) copies once per chunk (chunk starts are
        # multiples of W, so only the masked boundary pixels wrap).
        a_l = jnp.concatenate([zrow, a16[:cs - 1, :]], axis=0)   # pixel (w-1)
        a_r = jnp.concatenate([a16[1:, :], zrow], axis=0)        # pixel (w+1)
        actv_ref[m:m + cs, 0:NH] = a_l * mcol_ref[0, m:m + cs, :]
        actv_ref[m:m + cs, NH:2 * NH] = a16
        actv_ref[m:m + cs, 2 * NH:3 * NH] = a_r * mcol_ref[1, m:m + cs, :]

    # ---- zero the actv halo rows that fall outside the image (row zero-pad
    # of the gamma/beta conv); only the first / last row-tiles are affected.
    t = pl.program_id(1)

    @pl.when(t == 0)
    def _():
        actv_ref[0:W, :] = jnp.zeros((W, 3 * NH), bf16)

    @pl.when(t == pl.num_programs(1) - 1)
    def _():
        actv_ref[P1 - W:P1, :] = jnp.zeros((W, 3 * NH), bf16)

    # ---- stage 2: gamma|beta conv (K = 3*NH, fused 2C outputs) + InstanceNorm
    # apply + SPADE modulation, sub-tiled so acc (cs, 2C) f32 <= ~32 vregs.
    for (m, cs) in chunks2:
        acc = jnp.zeros((cs, 2 * C), f32)
        for khi in range(3):
            s = m + khi * W                            # aligned
            acc = acc + jnp.dot(actv_ref[s:s + cs, :], wgb_ref[khi],
                                preferred_element_type=f32)
        gb = acc + bgb_ref[...]
        gamma = gb[:, :C]
        beta = gb[:, C:]
        xv = x_ref[0, m:m + cs, :]
        normalized = (xv - mean_ref[0]) * rstd_ref[0]
        out_ref[0, m:m + cs, :] = normalized * (1.0 + gamma) + beta


# ---------------------------------------------------------------- wrapper

def _nearest_indices(out_size, in_size):
    # F.interpolate(mode='nearest'): src = floor(dst * in/out), clamped.
    idx = np.floor(np.arange(out_size) * (in_size / out_size)).astype(np.int32)
    return np.minimum(idx, in_size - 1)


def _row_chunks(total_rows, width, acc_row_bytes, budget_bytes):
    """Static (start, size) chunks; sizes are multiples of `width` spatial rows
    and the per-chunk f32 accumulator stays within `budget_bytes`."""
    rows = max(1, budget_bytes // (acc_row_bytes * width)) * width
    rows = min(rows, total_rows)
    chunks = []
    m = 0
    while m < total_rows:
        cs = min(rows, total_rows - m)
        chunks.append((m, cs))
        m += cs
    return tuple(chunks)


def spade_forward(x, segmap, w_s, b_s, w_g, b_g, w_b, b_b, *,
                  tile_rows=16, eps=1e-5):
    """SPADE.forward(x, segmap).  x: (N, C, H, W), segmap: (N, Cin, Hs, Ws).
    Conv weights are in PyTorch OIHW layout.  Returns (N, C, H, W)."""
    N, C, H, W = x.shape
    Cin = segmap.shape[1]
    NH = w_s.shape[0]                      # nhidden = 128 (fixed by the module)
    TH = tile_rows
    assert H % TH == 0, "H must be divisible by tile_rows"
    assert W % 8 == 0, "W must be a multiple of 8"
    n_ht = H // TH
    P0 = TH * W                            # output rows per tile
    P1 = (TH + 2) * W                      # actv rows per tile (1-row halo)
    P2 = (TH + 4) * W                      # seg rows per tile (2-row halo)

    # ---------------- plain-JAX glue: layout + nearest resize (data movement)
    x_flat = jnp.transpose(x, (0, 2, 3, 1)).reshape(N, H * W, C)

    Hs, Ws = segmap.shape[2], segmap.shape[3]
    ih = _nearest_indices(H, Hs)
    iw = _nearest_indices(W, Ws)
    seg_nhwc = jnp.transpose(segmap, (0, 2, 3, 1))
    seg_r = seg_nhwc[:, ih][:, :, iw]                       # (N, H, W, Cin)

    # kw-fold the segmap (with zero column padding) and cast to bf16 ONCE:
    # channel blocks are [pixel w-1 | pixel w | pixel w+1], so the shared conv
    # becomes 3 dots with K = 3*Cin instead of 9 dots with K = Cin.
    zcol = jnp.zeros((N, H, 1, Cin), seg_r.dtype)
    seg_l = jnp.concatenate([zcol, seg_r[:, :, :-1, :]], axis=2)
    seg_rr = jnp.concatenate([seg_r[:, :, 1:, :], zcol], axis=2)
    seg_kw = jnp.concatenate([seg_l, seg_r, seg_rr], axis=-1).astype(jnp.bfloat16)

    # zero-pad 2 halo rows top/bottom and cut overlapping (TH+4)-row windows.
    seg_pad = jnp.pad(seg_kw, ((0, 0), (2, 2), (0, 0), (0, 0)))
    rows = (TH * np.arange(n_ht, dtype=np.int32))[:, None] + \
        np.arange(TH + 4, dtype=np.int32)[None, :]          # (n_ht, TH+4)
    seg_tiles = jnp.take(seg_pad, jnp.asarray(rows), axis=1)
    seg_tiles = seg_tiles.reshape(N, n_ht, P2, 3 * Cin)

    # column masks for the in-kernel (w-1)/(w+1) activation copies.
    colv = np.arange(P1, dtype=np.int32) % W
    mcol_np = np.stack([(colv >= 1), (colv <= W - 2)]).astype(np.float32)
    mcol = jnp.asarray(np.broadcast_to(mcol_np[:, :, None], (2, P1, NH)).copy(),
                       dtype=jnp.bfloat16)

    # weights: OIHW -> (kh, kw, in, out), kw folded into the contraction dim,
    # gamma|beta fused along output channels, bf16 for the MXU.
    ws_fold = jnp.transpose(w_s, (2, 3, 1, 0)).reshape(3, 3 * Cin, NH)
    ws_fold = ws_fold.astype(jnp.bfloat16)                    # (3, 3*Cin, NH)
    wgb = jnp.concatenate([jnp.transpose(w_g, (2, 3, 1, 0)),
                           jnp.transpose(w_b, (2, 3, 1, 0))], axis=-1)
    wgb_fold = wgb.reshape(3, 3 * NH, 2 * C).astype(jnp.bfloat16)
    bs2 = b_s.reshape(1, NH).astype(jnp.float32)
    bgb2 = jnp.concatenate([b_g, b_b]).reshape(1, 2 * C).astype(jnp.float32)

    # ---------------- pass 1: InstanceNorm statistics (large memory blocks)
    rows_total = H * W
    stats_budget = 8 * 1024 * 1024
    rows_blk = rows_total                      # whole sample when it fits
    if rows_total * C * 4 > stats_budget:
        rows_blk = 8
        for d in range(8, rows_total + 1, 8):
            if rows_total % d == 0 and d * C * 4 <= stats_budget:
                rows_blk = d
    n_blk = rows_total // rows_blk

    mean, rstd = pl.pallas_call(
        functools.partial(_in_stats_kernel, inv_p=1.0 / float(rows_total),
                          eps=eps),
        out_shape=(jax.ShapeDtypeStruct((N, 1, C), jnp.float32),
                   jax.ShapeDtypeStruct((N, 1, C), jnp.float32)),
        grid=(N, n_blk),
        in_specs=[pl.BlockSpec((1, rows_blk, C), lambda n, t: (n, t, 0))],
        out_specs=(pl.BlockSpec((1, 1, C), lambda n, t: (n, 0, 0)),
                   pl.BlockSpec((1, 1, C), lambda n, t: (n, 0, 0))),
        compiler_params=pltpu.CompilerParams(
            dimension_semantics=("parallel", "arbitrary")),
    )(x_flat)

    # ---------------- pass 2: fused convs + modulation
    # In-kernel sub-tiling keeps live f32 accumulators at <= ~16/32 vregs.
    chunks1 = _row_chunks(P1, W, NH * 4, 64 * 1024)
    chunks2 = _row_chunks(P0, W, 2 * C * 4, 128 * 1024)
    # TODO(synk): for very wide rows (2*C*4*W > 128 KiB) also sub-tile the
    # gamma|beta output-channel dim inside the kernel.

    # explicit VMEM budget (double-buffered tiles + resident weights + scratch)
    blk_bytes = (
        2 * P2 * 3 * Cin * 2 +                 # seg tile (bf16)
        2 * 2 * P0 * C * 4 +                   # x + out tiles
        2 * 2 * C * 4 +                        # mean + rstd
        2 * 2 * P1 * NH * 2 +                  # column masks
        2 * (3 * 3 * Cin * NH * 2 + NH * 4 +
             3 * 3 * NH * 2 * C * 2 + 2 * C * 4) +  # weights / biases
        P1 * 3 * NH * 2)                       # actv scratch
    vmem_limit = int(min(max(2 * blk_bytes, 16 * 1024 * 1024),
                         64 * 1024 * 1024))

    kern = functools.partial(_spade_kernel, width=W, nhidden=NH,
                             chunks1=chunks1, chunks2=chunks2)
    # NOTE(megacore): keep N * n_ht >= 2 (ideally even) so both TensorCores on
    # v7x get work; both grid axes are "parallel".
    out_flat = pl.pallas_call(
        kern,
        out_shape=jax.ShapeDtypeStruct((N, H * W, C), jnp.float32),
        grid=(N, n_ht),
        in_specs=[
            pl.BlockSpec((1, 1, P2, 3 * Cin), lambda n, t: (n, t, 0, 0)),
            pl.BlockSpec((1, P0, C), lambda n, t: (n, t, 0)),
            pl.BlockSpec((1, 1, C), lambda n, t: (n, 0, 0)),
            pl.BlockSpec((1, 1, C), lambda n, t: (n, 0, 0)),
            # constant-index blocks are DMA'd once and stay resident
            pl.BlockSpec((2, P1, NH), lambda n, t: (0, 0, 0)),
            pl.BlockSpec((3, 3 * Cin, NH), lambda n, t: (0, 0, 0)),
            pl.BlockSpec((1, NH), lambda n, t: (0, 0)),
            pl.BlockSpec((3, 3 * NH, 2 * C), lambda n, t: (0, 0, 0)),
            pl.BlockSpec((1, 2 * C), lambda n, t: (0, 0)),
        ],
        out_specs=pl.BlockSpec((1, P0, C), lambda n, t: (n, t, 0)),
        scratch_shapes=[pltpu.VMEM((P1, 3 * NH), jnp.bfloat16)],
        compiler_params=pltpu.CompilerParams(
            dimension_semantics=("parallel", "parallel"),
            vmem_limit_bytes=vmem_limit),
    )(seg_tiles, x_flat, mean, rstd, mcol, ws_fold, bs2, wgb_fold, bgb2)

    out = out_flat.reshape(N, H, W, C)
    return jnp.transpose(out, (0, 3, 1, 2))                  # NCHW


# ------------------------------------------------------ pure-JAX reference

def _reference_forward(x, segmap, w_s, b_s, w_g, b_g, w_b, b_b, eps=1e-5):
    N, C, H, W = x.shape
    mean = jnp.mean(x, axis=(2, 3), keepdims=True)
    var = jnp.mean((x - mean) ** 2, axis=(2, 3), keepdims=True)
    normalized = (x - mean) * jax.lax.rsqrt(var + eps)

    Hs, Ws = segmap.shape[2], segmap.shape[3]
    ih = _nearest_indices(H, Hs)
    iw = _nearest_indices(W, Ws)
    seg_r = segmap[:, :, ih, :][:, :, :, iw]

    def conv(inp, w, b):
        out = jax.lax.conv_general_dilated(
            inp, w, window_strides=(1, 1), padding=((1, 1), (1, 1)),
            dimension_numbers=("NCHW", "OIHW", "NCHW"),
            precision=jax.lax.Precision.HIGHEST)
        return out + b[None, :, None, None]

    actv = jnp.maximum(conv(seg_r, w_s, b_s), 0.0)
    gamma = conv(actv, w_g, b_g)
    beta = conv(actv, w_b, b_b)
    return normalized * (1 + gamma) + beta


if __name__ == "__main__":
    key = jax.random.PRNGKey(0)
    ks = jax.random.split(key, 8)

    N = 2
    norm_nc = 128            # x channels
    label_nc = 32            # segmap channels
    nhidden = 128            # fixed by the module
    H = W = 32               # x spatial
    Hs = Ws = 16             # segmap spatial (nearest-upsampled 2x)

    x = jax.random.normal(ks[0], (N, norm_nc, H, W), jnp.float32)
    segmap = jax.random.normal(ks[1], (N, label_nc, Hs, Ws), jnp.float32)

    w_s = 0.05 * jax.random.normal(ks[2], (nhidden, label_nc, 3, 3), jnp.float32)
    b_s = 0.05 * jax.random.normal(ks[3], (nhidden,), jnp.float32)
    w_g = 0.05 * jax.random.normal(ks[4], (norm_nc, nhidden, 3, 3), jnp.float32)
    b_g = 0.05 * jax.random.normal(ks[5], (norm_nc,), jnp.float32)
    w_b = 0.05 * jax.random.normal(ks[6], (norm_nc, nhidden, 3, 3), jnp.float32)
    b_b = 0.05 * jax.random.normal(ks[7], (norm_nc,), jnp.float32)

    out = spade_forward(x, segmap, w_s, b_s, w_g, b_g, w_b, b_b, tile_rows=16)
    out = jax.block_until_ready(out)
    assert out.shape == (N, norm_nc, H, W), out.shape

    ref = _reference_forward(x, segmap, w_s, b_s, w_g, b_g, w_b, b_b)
    diff = out - ref
    max_err = float(jnp.max(jnp.abs(diff)))
    rms_err = float(jnp.sqrt(jnp.mean(diff * diff)))
    # tolerance reflects bf16 MXU operands (f32 accumulation); any structural
    # bug (wrong shift / halo / stats) produces O(1) rms error.
    assert max_err < 2e-1 and rms_err < 2e-2, (max_err, rms_err)
    print("KERNEL_OK")
</pallas_src>

<mosaic_0001>
module attributes {stable_mosaic.version = 11 : i64} {
  func.func @_in_stats_kernel(%arg0: i32, %arg1: i32, %arg2: memref<1x1024x128xf32, #tpu.memory_space<vmem>>, %arg3: memref<1x1x128xf32, #tpu.memory_space<vmem>>, %arg4: memref<1x1x128xf32, #tpu.memory_space<vmem>>) attributes {dimension_semantics = [#tpu.dimension_semantics<parallel>, #tpu.dimension_semantics<arbitrary>], iteration_bounds = array<i64: 2, 1>, scalar_prefetch = 0 : i64, scratch_operands = 0 : i64, tpu.core_type = #tpu.core_type<tc>, window_params = [{transform_indices = @transform_0, window_bounds = array<i64: 1, 1024, 128>}, {transform_indices = @transform_1, window_bounds = array<i64: 1, 1, 128>}, {transform_indices = @transform_2, window_bounds = array<i64: 1, 1, 128>}]} {
    %c0_i32 = arith.constant 0 : i32
    %0 = arith.cmpi eq, %arg1, %c0_i32 : i32
    %1 = arith.extui %0 : i1 to i32
    %c0_i32_0 = arith.constant 0 : i32
    %2 = arith.cmpi ne, %1, %c0_i32_0 : i32
    scf.if %2 {
      %cst_18 = arith.constant 0.000000e+00 : f32
      %25 = vector.broadcast %cst_18 : f32 to vector<1x1x128xf32>
      %c0_19 = arith.constant 0 : index
      %c0_20 = arith.constant 0 : index
      %c0_21 = arith.constant 0 : index
      %26 = vector.load %arg3[%c0_19, %c0_20, %c0_21] : memref<1x1x128xf32, #tpu.memory_space<vmem>>, vector<1x1x128xf32>
      tpu.vector_store %arg3[%c0_19, %c0_20, %c0_21], %25 {strides = array<i32>} : memref<1x1x128xf32, #tpu.memory_space<vmem>>, vector<1x1x128xf32>,
      %cst_22 = arith.constant 0.000000e+00 : f32
      %27 = vector.broadcast %cst_22 : f32 to vector<1x1x128xf32>
      %c0_23 = arith.constant 0 : index
      %c0_24 = arith.constant 0 : index
      %c0_25 = arith.constant 0 : index
      %28 = vector.load %arg4[%c0_23, %c0_24, %c0_25] : memref<1x1x128xf32, #tpu.memory_space<vmem>>, vector<1x1x128xf32>
      tpu.vector_store %arg4[%c0_23, %c0_24, %c0_25], %27 {strides = array<i32>} : memref<1x1x128xf32, #tpu.memory_space<vmem>>, vector<1x1x128xf32>,
    } else {
    }
    %c0 = arith.constant 0 : index
    %c0_1 = arith.constant 0 : index
    %c0_2 = arith.constant 0 : index
    %3 = vector.load %arg2[%c0, %c0_1, %c0_2] : memref<1x1024x128xf32, #tpu.memory_space<vmem>>, vector<1x1024x128xf32>
    %4 = vector.shape_cast %3 : vector<1x1024x128xf32> to vector<1024x128xf32>
    %c0_3 = arith.constant 0 : index
    %c0_4 = arith.constant 0 : index
    %c0_5 = arith.constant 0 : index
    %5 = vector.load %arg3[%c0_3, %c0_4, %c0_5] : memref<1x1x128xf32, #tpu.memory_space<vmem>>, vector<1x1x128xf32>
    %6 = vector.shape_cast %5 : vector<1x1x128xf32> to vector<1x128xf32>
    %cst = arith.constant dense<0.000000e+00> : vector<128xf32>
    %7 = vector.multi_reduction <add>, %4, %cst [0] : vector<1024x128xf32> to vector<128xf32>
    %8 = vector.shape_cast %7 : vector<128xf32> to vector<1x128xf32>
    %9 = arith.addf %6, %8 : vector<1x128xf32>
    %c0_6 = arith.constant 0 : index
    %c0_7 = arith.constant 0 : index
    %c0_8 = arith.constant 0 : index
    %10 = vector.load %arg3[%c0_6, %c0_7, %c0_8] : memref<1x1x128xf32, #tpu.memory_space<vmem>>, vector<1x1x128xf32>
    %11 = vector.shape_cast %10 : vector<1x1x128xf32> to vector<1x128xf32>
    %12 = vector.shape_cast %9 : vector<1x128xf32> to vector<1x1x128xf32>
    tpu.vector_store %arg3[%c0_6, %c0_7, %c0_8], %12 {strides = array<i32>} : memref<1x1x128xf32, #tpu.memory_space<vmem>>, vector<1x1x128xf32>,
    %c0_9 = arith.constant 0 : index
    %c0_10 = arith.constant 0 : index
    %c0_11 = arith.constant 0 : index
    %13 = vector.load %arg4[%c0_9, %c0_10, %c0_11] : memref<1x1x128xf32, #tpu.memory_space<vmem>>, vector<1x1x128xf32>
    %14 = vector.shape_cast %13 : vector<1x1x128xf32> to vector<1x128xf32>
    %15 = arith.mulf %4, %4 : vector<1024x128xf32>
    %cst_12 = arith.constant dense<0.000000e+00> : vector<128xf32>
    %16 = vector.multi_reduction <add>, %15, %cst_12 [0] : vector<1024x128xf32> to vector<128xf32>
    %17 = vector.shape_cast %16 : vector<128xf32> to vector<1x128xf32>
    %18 = arith.addf %14, %17 : vector<1x128xf32>
    %c0_13 = arith.constant 0 : index
    %c0_14 = arith.constant 0 : index
    %c0_15 = arith.constant 0 : index
    %19 = vector.load %arg4[%c0_13, %c0_14, %c0_15] : memref<1x1x128xf32, #tpu.memory_space<vmem>>, vector<1x1x128xf32>
    %20 = vector.shape_cast %19 : vector<1x1x128xf32> to vector<1x128xf32>
    %21 = vector.shape_cast %18 : vector<1x128xf32> to vector<1x1x128xf32>
    tpu.vector_store %arg4[%c0_13, %c0_14, %c0_15], %21 {strides = array<i32>} : memref<1x1x128xf32, #tpu.memory_space<vmem>>, vector<1x1x128xf32>,
    %c0_i32_16 = arith.constant 0 : i32
    %22 = arith.cmpi eq, %arg1, %c0_i32_16 : i32
    %23 = arith.extui %22 : i1 to i32
    %c0_i32_17 = arith.constant 0 : i32
    %24 = arith.cmpi ne, %23, %c0_i32_17 : i32
    scf.if %24 {
      %c0_18 = arith.constant 0 : index
      %c0_19 = arith.constant 0 : index
      %c0_20 = arith.constant 0 : index
      %25 = vector.load %arg3[%c0_18, %c0_19, %c0_20] : memref<1x1x128xf32, #tpu.memory_space<vmem>>, vector<1x1x128xf32>
      %26 = vector.shape_cast %25 : vector<1x1x128xf32> to vector<1x128xf32>
      %cst_21 = arith.constant 9.765625E-4 : f32
      %27 = vector.broadcast %cst_21 : f32 to vector<1x128xf32>
      %28 = arith.mulf %26, %27 : vector<1x128xf32>
      %c0_22 = arith.constant 0 : index
      %c0_23 = arith.constant 0 : index
      %c0_24 = arith.constant 0 : index
      %29 = vector.load %arg4[%c0_22, %c0_23, %c0_24] : memref<1x1x128xf32, #tpu.memory_space<vmem>>, vector<1x1x128xf32>
      %30 = vector.shape_cast %29 : vector<1x1x128xf32> to vector<1x128xf32>
      %cst_25 = arith.constant 9.765625E-4 : f32
      %31 = vector.broadcast %cst_25 : f32 to vector<1x128xf32>
      %32 = arith.mulf %30, %31 : vector<1x128xf32>
      %33 = arith.mulf %28, %28 : vector<1x128xf32>
      %34 = arith.subf %32, %33 : vector<1x128xf32>
      %c0_26 = arith.constant 0 : index
      %c0_27 = arith.constant 0 : index
      %c0_28 = arith.constant 0 : index
      %35 = vector.load %arg3[%c0_26, %c0_27, %c0_28] : memref<1x1x128xf32, #tpu.memory_space<vmem>>, vector<1x1x128xf32>
      %36 = vector.shape_cast %35 : vector<1x1x128xf32> to vector<1x128xf32>
      %37 = vector.shape_cast %28 : vector<1x128xf32> to vector<1x1x128xf32>
      tpu.vector_store %arg3[%c0_26, %c0_27, %c0_28], %37 {strides = array<i32>} : memref<1x1x128xf32, #tpu.memory_space<vmem>>, vector<1x1x128xf32>,
      %cst_29 = arith.constant 9.99999974E-6 : f32
      %38 = vector.broadcast %cst_29 : f32 to vector<1x128xf32>
      %39 = arith.addf %34, %38 : vector<1x128xf32>
      %40 = math.rsqrt %39 : vector<1x128xf32>
      %c0_30 = arith.constant 0 : index
      %c0_31 = arith.constant 0 : index
      %c0_32 = arith.constant 0 : index
      %41 = vector.load %arg4[%c0_30, %c0_31, %c0_32] : memref<1x1x128xf32, #tpu.memory_space<vmem>>, vector<1x1x128xf32>
      %42 = vector.shape_cast %41 : vector<1x1x128xf32> to vector<1x128xf32>
      %43 = vector.shape_cast %40 : vector<1x128xf32> to vector<1x1x128xf32>
      tpu.vector_store %arg4[%c0_30, %c0_31, %c0_32], %43 {strides = array<i32>} : memref<1x1x128xf32, #tpu.memory_space<vmem>>, vector<1x1x128xf32>,
    } else {
    }
    return
  }
  func.func @transform_0(%arg0: i32, %arg1: i32) -> (i32, i32, i32) {
    %c0_i32 = arith.constant 0 : i32
    %c0_i32_0 = arith.constant 0 : i32
    return %arg0, %arg1, %c0_i32 : i32, i32, i32
  }
  func.func @transform_1(%arg0: i32, %arg1: i32) -> (i32, i32, i32) {
    %c0_i32 = arith.constant 0 : i32
    %c0_i32_0 = arith.constant 0 : i32
    %c0_i32_1 = arith.constant 0 : i32
    return %arg0, %c0_i32, %c0_i32_0 : i32, i32, i32
  }
  func.func @transform_2(%arg0: i32, %arg1: i32) -> (i32, i32, i32) {
    %c0_i32 = arith.constant 0 : i32
    %c0_i32_0 = arith.constant 0 : i32
    %c0_i32_1 = arith.constant 0 : i32
    return %arg0, %c0_i32, %c0_i32_0 : i32, i32, i32
  }
}

</mosaic_0001>

<llo_original>
// kernel: tpu_custom_call.1
$region0: #{tpu_custom_call.1}
  #allocation0 [shape = 'u32[]', space=smem, size = 0x4, offset = 0x4, fixed_abs, tag = 'smem constant byte address 0x4 - core index']
  #allocation1 [shape = 'u32[72,128]{1,0:T(1,128)}', space=vmem, size = 0x9000, scoped, tag = 'internal scratch']
  %s0 = inlined_call_operand.hbm [shape: f32[2,1024,128], index: 0, kind: input, shape index: {}]
  %s1 = inlined_call_operand.hbm [shape: f32[2,1,128], index: 1, kind: output, shape index: {0}]
  %s2 = inlined_call_operand.hbm [shape: f32[2,1,128], index: 2, kind: output, shape index: {1}]
  %3 = xla_tuple %s1, %s2
  %s4 = sld [smem:[#allocation0]]
  $region57: #{tpu_custom_call.1} parent=0
    _
  %s6 = ssub.s32 1, %s4
  %s7 = scalar_select 0, %s6, %s4
  $region1: #{tpu_custom_call.1} parent=0
    #allocation2 [shape = 'u8[1048576]{0}', space=vmem, size = 0x100000, scoped, tag = 'input window, operand 0']
    #allocation3 [shape = 's32[2]{0}', space=sflag, size = 0x8, scoped, tag = 'scoped memory for tpu_custom_call.1']
    #allocation4 [shape = 's32[2]{0}', space=sflag, size = 0x8, scoped, tag = 'scoped memory for tpu_custom_call.1']
    #allocation5 [shape = 'u8[1024]{0}', space=vmem, size = 0x400, scoped, tag = 'output window, operand 0']
    #allocation6 [shape = 'u8[1024]{0}', space=vmem, size = 0x400, scoped, tag = 'output window, operand 1']
    #allocation7 [shape = 's32[2]{0}', space=sflag, size = 0x8, scoped, tag = 'scoped memory for tpu_custom_call.1']
    %8 = vsyncpa [#allocation3], 0
    %s9 = scalar_lea.sflag [#allocation3], 1
    %10 = vsyncpa %s9, 0
    %11 = vsyncpa [#allocation4], 0
    %s12 = scalar_lea.sflag [#allocation4], 1
    %13 = vsyncpa %s12, 0
    %14 = vsyncpa [#allocation7], 0
    %s15 = scalar_lea.sflag [#allocation7], 1
    %16 = vsyncpa %s15, 0
    loop: start=0, step=1, limit=4
    $region2: #{tpu_custom_call.1} parent=1 // loop_pre_header
      _
    $region3: #{tpu_custom_call.1} parent=1 // loop_header
      %s18 = sphi 0, %s22
      %p19 = scmp.ge.s32.totalorder %s18, 4
      %s25 = sphi 0, %s37
      %s26 = sphi 0, %s33
      %s27 = sphi 0, %s25
      %s28 = sphi 0, %s26
      %s29 = sphi 0, %s27
      %s30 = sphi 0, %s28
      %s42 = sphi 0, %s44
      %s45 = sphi 0, %s42
      %s46 = sphi 0, %s45
      %s62 = sphi 0, %s46
      %s68 = sphi 0, %s70
      %s71 = sphi 0, %s68
      %s72 = sphi 0, %s71
      %s88 = sphi 0, %s72
      %s94 = sphi 0, %s96
      %s97 = sphi 0, %s94
      %s98 = sphi 0, %s97
      %s114 = sphi 0, %s98
    $region4: #{tpu_custom_call.1} parent=1 // loop_header_branch
      %21 = sbr.rel (%p19) target = $region8
    $region5: #{tpu_custom_call.1} parent=1 // loop_body
      %s23 = ssub.s32 %s18, 1
      %s24 = ssub.s32 %s18, 2
      %s31 = sadd.s32 1, %s26
      %p32 = scmp.ge.s32.totalorder %s31, 1
      %s33 = scalar_select %p32, 0, %s31
      %s34 = sadd.s32 1, %s25
      %s35 = scalar_select %p32, %s34, %s25
      %p36 = scmp.ge.s32.totalorder %s35, 2
      %s37 = scalar_select %p36, 0, %s35
      %s38 = ssub.s32 %s25, %s37
      %s39 = ssub.s32 %s26, %s33
      %s40 = sor.u32 %s38, %s39
      %p41 = scmp.eq.s32.totalorder %s40, 0
      %s43 = sadd.s32 %s42, 1
      %s44 = scalar_select %p41, %s42, %s43
      %p47 = pneg %p41
      %p48 = scmp.eq.s32.totalorder %s18, 1
      %p49 = por %p47, %p48
      %p50 = scmp.ne.s32.totalorder %s42, %s45
      %p51 = scmp.eq.s32.totalorder %s18, 0
      %p52 = por %p50, %p51
      %p53 = scmp.ne.s32.totalorder %s42, %s45
      %p54 = scmp.eq.s32.totalorder %s23, 1
      %p55 = por %p53, %p54
      %p56 = scmp.ne.s32.totalorder %s45, %s46
      %p57 = scmp.eq.s32.totalorder %s23, 0
      %p58 = por %p56, %p57
      %p59 = scmp.ne.s32.totalorder %s45, %s46
      %p60 = scmp.eq.s32.totalorder %s24, 1
      %p61 = por %p59, %p60
      %p63 = scmp.ne.s32.totalorder %s46, %s62
      %p64 = scmp.eq.s32.totalorder %s24, 0
      %p65 = por %p63, %p64
      %s66 = ssub.s32 %s25, %s37
      %p67 = scmp.eq.s32.totalorder %s66, 0
      %s69 = sadd.s32 %s68, 1
      %s70 = scalar_select %p67, %s68, %s69
      %p73 = pneg %p67
      %p74 = scmp.eq.s32.totalorder %s18, 1
      %p75 = por %p73, %p74
      %p76 = scmp.ne.s32.totalorder %s68, %s71
      %p77 = scmp.eq.s32.totalorder %s18, 0
      %p78 = por %p76, %p77
      %p79 = scmp.ne.s32.totalorder %s68, %s71
      %p80 = scmp.eq.s32.totalorder %s23, 1
      %p81 = por %p79, %p80
      %p82 = scmp.ne.s32.totalorder %s71, %s72
      %p83 = scmp.eq.s32.totalorder %s23, 0
      %p84 = por %p82, %p83
      %p85 = scmp.ne.s32.totalorder %s71, %s72
      %p86 = scmp.eq.s32.totalorder %s24, 1
      %p87 = por %p85, %p86
      %p89 = scmp.ne.s32.totalorder %s72, %s88
      %p90 = scmp.eq.s32.totalorder %s24, 0
      %p91 = por %p89, %p90
      %s92 = ssub.s32 %s25, %s37
      %p93 = scmp.eq.s32.totalorder %s92, 0
      %s95 = sadd.s32 %s94, 1
      %s96 = scalar_select %p93, %s94, %s95
      %p99 = pneg %p93
      %p100 = scmp.eq.s32.totalorder %s18, 1
      %p101 = por %p99, %p100
      %p102 = scmp.ne.s32.totalorder %s94, %s97
      %p103 = scmp.eq.s32.totalorder %s18, 0
      %p104 = por %p102, %p103
      %p105 = scmp.ne.s32.totalorder %s94, %s97
      %p106 = scmp.eq.s32.totalorder %s23, 1
      %p107 = por %p105, %p106
      %p108 = scmp.ne.s32.totalorder %s97, %s98
      %p109 = scmp.eq.s32.totalorder %s23, 0
      %p110 = por %p108, %p109
      %p111 = scmp.ne.s32.totalorder %s97, %s98
      %p112 = scmp.eq.s32.totalorder %s24, 1
      %p113 = por %p111, %p112
      %p115 = scmp.ne.s32.totalorder %s98, %s114
      %p116 = scmp.eq.s32.totalorder %s24, 0
      %p117 = por %p115, %p116
      %p118 = scmp.le.s32.totalorder 1, %s18
      %p119 = scmp.lt.s32.totalorder %s18, 3
      %p120 = pnand %p118, %p119
      %p121 = pneg %p120
      // Predicated region
      $region9: #{tpu_custom_call.1} parent=5 // pred_check
        _
      $region10: #{tpu_custom_call.1} parent=5 // pred_check_branch
        %123 = sbr.rel (%p120) target = $region12
      $region11: #{tpu_custom_call.1} parent=5 // pred_region
        %s124 = ssub.s32 %s18, 1
      $region12: #{tpu_custom_call.1} parent=5 // pred_fallthru
        _
      %p125 = scmp.lt.s32.totalorder %s18, 2
      // Predicated region
      $region13: #{tpu_custom_call.1} parent=5 // pred_check
        %p126 = pneg %p125
      $region14: #{tpu_custom_call.1} parent=5 // pred_check_branch
        %128 = sbr.rel (%p126) target = $region16
      $region15: #{tpu_custom_call.1} parent=5 // pred_region
        // Predicated region
        $region17: #{tpu_custom_call.1} parent=15 // pred_check
          %p129 = pneg %p52
        $region18: #{tpu_custom_call.1} parent=15 // pred_check_branch
          %131 = sbr.rel (%p129) target = $region20
        $region19: #{tpu_custom_call.1} parent=15 // pred_region
          %s132 = sand.u32 %s42, 1
          %s133 = scalar_lea.sflag [#allocation3], %s132
          %s134 = sand.u32 %s42, 1
          %s135 = smul.addr %s134, 1024
          %s136 = scalar_lea.vmem [#allocation2], %s135
          %s137 = smul.u32 128, %s26
          %139 = vsyncadd %s133, 0
          %s140 = smul.addr %s25, 128
          %s141 = sadd.s32 %s137, %s140
          %s142 = smul.addr %s141, 8
          %s143 = scalar_lea.hbm %s0, %s142
          %s144 = sshll.u32 %s143, 4
          %s145 = int_to_ptr.hbm [resolvable:$true] %s144
          %s146 = sshll.u32 %s136, 4
          %s147 = int_to_ptr.vmem [resolvable:$true] %s146
          %152 = dma.hbm_to_vmem [thread:$0]  %s145, 16384, %s147, %s133, 128, 128, 8
        $region20: #{tpu_custom_call.1} parent=15 // pred_fallthru
          _
      $region16: #{tpu_custom_call.1} parent=5 // pred_fallthru
        _
      %p153 = scmp.le.s32.totalorder 1, %s18
      %p154 = scmp.lt.s32.totalorder %s18, 3
      %p155 = pnand %p153, %p154
      %p156 = pneg %p155
      // Predicated region
      $region21: #{tpu_custom_call.1} parent=5 // pred_check
        _
      $region22: #{tpu_custom_call.1} parent=5 // pred_check_branch
        %158 = sbr.rel (%p155) target = $region24
      $region23: #{tpu_custom_call.1} parent=5 // pred_region
        %s159 = ssub.s32 %s18, 1
        %s160 = sand.u32 %s45, 1
        %s161 = scalar_lea.sflag [#allocation3], %s160
        %s162 = sand.u32 %s45, 1
        %s163 = smul.addr %s162, 1024
        %s164 = scalar_lea.vmem [#allocation2], %s163
        // Predicated region
        $region25: #{tpu_custom_call.1} parent=23 // pred_check
          %p165 = pneg %p58
        $region26: #{tpu_custom_call.1} parent=23 // pred_check_branch
          %167 = sbr.rel (%p165) target = $region28
        $region27: #{tpu_custom_call.1} parent=23 // pred_region
          %169 = dma.done %s161, 16384
        $region28: #{tpu_custom_call.1} parent=23 // pred_fallthru
          _
        %s170 = sand.u32 %s45, 1
        %s171 = scalar_lea.sflag [#allocation3], %s170
        %s172 = sand.u32 %s45, 1
        %s173 = smul.addr %s172, 1024
        %s174 = scalar_lea.vmem [#allocation2], %s173
        %p175 = pneg %p58
        %p176 = pneg %p55
        %p177 = pneg %p84
        %p178 = pneg %p81
        %s179 = sand.u32 %s71, 1
        %s180 = scalar_lea.sflag [#allocation4], %s179
        %s181 = sand.u32 %s71, 1
        %s182 = scalar_lea.vmem [#allocation5], %s181
        %p183 = pneg %p110
        %p184 = pneg %p107
        %s185 = sand.u32 %s97, 1
        %s186 = scalar_lea.sflag [#allocation7], %s185
        %s187 = sand.u32 %s97, 1
        %s188 = scalar_lea.vmem [#allocation6], %s187
        %s189 = smul.u32 128, %s28
        %p190 = scmp.eq.s32.totalorder %s28, 0
        // Predicated region
        $region29: #{tpu_custom_call.1} parent=23 // pred_check
          %p191 = pneg %p190
        $region30: #{tpu_custom_call.1} parent=23 // pred_check_branch
          %193 = sbr.rel (%p191) target = $region32
        $region31: #{tpu_custom_call.1} parent=23 // pred_region
          %194 = vst [vmem:[%s182] sm:$0x1] 0.0
          %195 = vst [vmem:[%s188] sm:$0x1] 0.0
        $region32: #{tpu_custom_call.1} parent=23 // pred_fallthru
          _
        %v196 = vld [vmem:[%s164] sm:$0xff]
        %v197 = vld [vmem:[%s164 + $0x8] sm:$0xff]
        %v198 = vld [vmem:[%s164 + $0x10] sm:$0xff]
        %v199 = vld [vmem:[%s164 + $0x18] sm:$0xff]
        %v200 = vld [vmem:[%s164 + $0x20] sm:$0xff]
        %v201 = vld [vmem:[%s164 + $0x28] sm:$0xff]
        %v202 = vld [vmem:[%s164 + $0x30] sm:$0xff]
        %v203 = vld [vmem:[%s164 + $0x38] sm:$0xff]
        %v204 = vld [vmem:[%s164 + $0x40] sm:$0xff]
        %v205 = vld [vmem:[%s164 + $0x48] sm:$0xff]
        %v206 = vld [vmem:[%s164 + $0x50] sm:$0xff]
        %v207 = vld [vmem:[%s164 + $0x58] sm:$0xff]
        %v208 = vld [vmem:[%s164 + $0x60] sm:$0xff]
        %v209 = vld [vmem:[%s164 + $0x68] sm:$0xff]
        %v210 = vld [vmem:[%s164 + $0x70] sm:$0xff]
        %v211 = vld [vmem:[%s164 + $0x78] sm:$0xff]
        %v212 = vld [vmem:[%s164 + $0x80] sm:$0xff]
        %v213 = vld [vmem:[%s164 + $0x88] sm:$0xff]
        %v214 = vld [vmem:[%s164 + $0x90] sm:$0xff]
        %v215 = vld [vmem:[%s164 + $0x98] sm:$0xff]
        %v216 = vld [vmem:[%s164 + $0xa0] sm:$0xff]
        %v217 = vld [vmem:[%s164 + $0xa8] sm:$0xff]
        %v218 = vld [vmem:[%s164 + $0xb0] sm:$0xff]
        %v219 = vld [vmem:[%s164 + $0xb8] sm:$0xff]
        %v220 = vld [vmem:[%s164 + $0xc0] sm:$0xff]
        %v221 = vld [vmem:[%s164 + $0xc8] sm:$0xff]
        %v222 = vld [vmem:[%s164 + $0xd0] sm:$0xff]
        %v223 = vld [vmem:[%s164 + $0xd8] sm:$0xff]
        %v224 = vld [vmem:[%s164 + $0xe0] sm:$0xff]
        %v225 = vld [vmem:[%s164 + $0xe8] sm:$0xff]
        %v226 = vld [vmem:[%s164 + $0xf0] sm:$0xff]
        %v227 = vld [vmem:[%s164 + $0xf8] sm:$0xff]
        %v228 = vld [vmem:[%s164 + $0x100] sm:$0xff]
        %v229 = vld [vmem:[%s164 + $0x108] sm:$0xff]
        %v230 = vld [vmem:[%s164 + $0x110] sm:$0xff]
        %v231 = vld [vmem:[%s164 + $0x118] sm:$0xff]
        %v232 = vld [vmem:[%s164 + $0x120] sm:$0xff]
        %v233 = vld [vmem:[%s164 + $0x128] sm:$0xff]
        %v234 = vld [vmem:[%s164 + $0x130] sm:$0xff]
        %v235 = vld [vmem:[%s164 + $0x138] sm:$0xff]
        %v236 = vld [vmem:[%s164 + $0x140] sm:$0xff]
        %v237 = vld [vmem:[%s164 + $0x148] sm:$0xff]
        %v238 = vld [vmem:[%s164 + $0x150] sm:$0xff]
        %v239 = vld [vmem:[%s164 + $0x158] sm:$0xff]
        %v240 = vld [vmem:[%s164 + $0x160] sm:$0xff]
        %v241 = vld [vmem:[%s164 + $0x168] sm:$0xff]
        %v242 = vld [vmem:[%s164 + $0x170] sm:$0xff]
        %v243 = vld [vmem:[%s164 + $0x178] sm:$0xff]
        %v244 = vld [vmem:[%s164 + $0x180] sm:$0xff]
        %v245 = vld [vmem:[%s164 + $0x188] sm:$0xff]
        %v246 = vld [vmem:[%s164 + $0x190] sm:$0xff]
        %v247 = vld [vmem:[%s164 + $0x198] sm:$0xff]
        %v248 = vld [vmem:[%s164 + $0x1a0] sm:$0xff]
        %v249 = vld [vmem:[%s164 + $0x1a8] sm:$0xff]
        %v250 = vld [vmem:[%s164 + $0x1b0] sm:$0xff]
        %v251 = vld [vmem:[%s164 + $0x1b8] sm:$0xff]
        %v252 = vld [vmem:[%s164 + $0x1c0] sm:$0xff]
        %v253 = vld [vmem:[%s164 + $0x1c8] sm:$0xff]
        %v254 = vld [vmem:[%s164 + $0x1d0] sm:$0xff]
        %v255 = vld [vmem:[%s164 + $0x1d8] sm:$0xff]
        %v256 = vld [vmem:[%s164 + $0x1e0] sm:$0xff]
        %v257 = vld [vmem:[%s164 + $0x1e8] sm:$0xff]
        %v258 = vld [vmem:[%s164 + $0x1f0] sm:$0xff]
        %v259 = vld [vmem:[%s164 + $0x1f8] sm:$0xff]
        %v260 = vld [vmem:[%s164 + $0x200] sm:$0xff]
        %v261 = vld [vmem:[%s164 + $0x208] sm:$0xff]
        %v262 = vld [vmem:[%s164 + $0x210] sm:$0xff]
        %v263 = vld [vmem:[%s164 + $0x218] sm:$0xff]
        %v264 = vld [vmem:[%s164 + $0x220] sm:$0xff]
        %v265 = vld [vmem:[%s164 + $0x228] sm:$0xff]
        %v266 = vld [vmem:[%s164 + $0x230] sm:$0xff]
        %v267 = vld [vmem:[%s164 + $0x238] sm:$0xff]
        %v268 = vld [vmem:[%s164 + $0x240] sm:$0xff]
        %v269 = vld [vmem:[%s164 + $0x248] sm:$0xff]
        %v270 = vld [vmem:[%s164 + $0x250] sm:$0xff]
        %v271 = vld [vmem:[%s164 + $0x258] sm:$0xff]
        %v272 = vld [vmem:[%s164 + $0x260] sm:$0xff]
        %v273 = vld [vmem:[%s164 + $0x268] sm:$0xff]
        %v274 = vld [vmem:[%s164 + $0x270] sm:$0xff]
        %v275 = vld [vmem:[%s164 + $0x278] sm:$0xff]
        %v276 = vld [vmem:[%s164 + $0x280] sm:$0xff]
        %v277 = vld [vmem:[%s164 + $0x288] sm:$0xff]
        %v278 = vld [vmem:[%s164 + $0x290] sm:$0xff]
        %v279 = vld [vmem:[%s164 + $0x298] sm:$0xff]
        %v280 = vld [vmem:[%s164 + $0x2a0] sm:$0xff]
        %v281 = vld [vmem:[%s164 + $0x2a8] sm:$0xff]
        %v282 = vld [vmem:[%s164 + $0x2b0] sm:$0xff]
        %v283 = vld [vmem:[%s164 + $0x2b8] sm:$0xff]
        %v284 = vld [vmem:[%s164 + $0x2c0] sm:$0xff]
        %v285 = vld [vmem:[%s164 + $0x2c8] sm:$0xff]
        %v286 = vld [vmem:[%s164 + $0x2d0] sm:$0xff]
        %v287 = vld [vmem:[%s164 + $0x2d8] sm:$0xff]
        %v288 = vld [vmem:[%s164 + $0x2e0] sm:$0xff]
        %v289 = vld [vmem:[%s164 + $0x2e8] sm:$0xff]
        %v290 = vld [vmem:[%s164 + $0x2f0] sm:$0xff]
        %v291 = vld [vmem:[%s164 + $0x2f8] sm:$0xff]
        %v292 = vld [vmem:[%s164 + $0x300] sm:$0xff]
        %v293 = vld [vmem:[%s164 + $0x308] sm:$0xff]
        %v294 = vld [vmem:[%s164 + $0x310] sm:$0xff]
        %v295 = vld [vmem:[%s164 + $0x318] sm:$0xff]
        %v296 = vld [vmem:[%s164 + $0x320] sm:$0xff]
        %v297 = vld [vmem:[%s164 + $0x328] sm:$0xff]
        %v298 = vld [vmem:[%s164 + $0x330] sm:$0xff]
        %v299 = vld [vmem:[%s164 + $0x338] sm:$0xff]
        %v300 = vld [vmem:[%s164 + $0x340] sm:$0xff]
        %v301 = vld [vmem:[%s164 + $0x348] sm:$0xff]
        %v302 = vld [vmem:[%s164 + $0x350] sm:$0xff]
        %v303 = vld [vmem:[%s164 + $0x358] sm:$0xff]
        %v304 = vld [vmem:[%s164 + $0x360] sm:$0xff]
        %v305 = vld [vmem:[%s164 + $0x368] sm:$0xff]
        %v306 = vld [vmem:[%s164 + $0x370] sm:$0xff]
        %v307 = vld [vmem:[%s164 + $0x378] sm:$0xff]
        %v308 = vld [vmem:[%s164 + $0x380] sm:$0xff]
        %v309 = vld [vmem:[%s164 + $0x388] sm:$0xff]
        %v310 = vld [vmem:[%s164 + $0x390] sm:$0xff]
        %v311 = vld [vmem:[%s164 + $0x398] sm:$0xff]
        %v312 = vld [vmem:[%s164 + $0x3a0] sm:$0xff]
        %v313 = vld [vmem:[%s164 + $0x3a8] sm:$0xff]
        %v314 = vld [vmem:[%s164 + $0x3b0] sm:$0xff]
        %v315 = vld [vmem:[%s164 + $0x3b8] sm:$0xff]
        %v316 = vld [vmem:[%s164 + $0x3c0] sm:$0xff]
        %v317 = vld [vmem:[%s164 + $0x3c8] sm:$0xff]
        %v318 = vld [vmem:[%s164 + $0x3d0] sm:$0xff]
        %v319 = vld [vmem:[%s164 + $0x3d8] sm:$0xff]
        %v320 = vld [vmem:[%s164 + $0x3e0] sm:$0xff]
        %v321 = vld [vmem:[%s164 + $0x3e8] sm:$0xff]
        %v322 = vld [vmem:[%s164 + $0x3f0] sm:$0xff]
        %v323 = vld [vmem:[%s164 + $0x3f8] sm:$0xff]
        %v324 = vld [vmem:[%s182] sm:$0x1]
        %v325 = vadd.f32 %v196, %v197
        %v326 = vadd.f32 %v325, %v198
        %v327 = vadd.f32 %v326, %v199
        %v328 = vadd.f32 %v327, %v200
        %v329 = vadd.f32 %v328, %v201
        %v330 = vadd.f32 %v329, %v202
        %v331 = vadd.f32 %v330, %v203
        %v332 = vadd.f32 %v331, %v204
        %v333 = vadd.f32 %v332, %v205
        %v334 = vadd.f32 %v333, %v206
        %v335 = vadd.f32 %v334, %v207
        %v336 = vadd.f32 %v335, %v208
        %v337 = vadd.f32 %v336, %v209
        %v338 = vadd.f32 %v337, %v210
        %v339 = vadd.f32 %v338, %v211
        %v340 = vadd.f32 %v339, %v212
        %v341 = vadd.f32 %v340, %v213
        %v342 = vadd.f32 %v341, %v214
        %v343 = vadd.f32 %v342, %v215
        %v344 = vadd.f32 %v343, %v216
        %v345 = vadd.f32 %v344, %v217
        %v346 = vadd.f32 %v345, %v218
        %v347 = vadd.f32 %v346, %v219
        %v348 = vadd.f32 %v347, %v220
        %v349 = vadd.f32 %v348, %v221
        %v350 = vadd.f32 %v349, %v222
        %v351 = vadd.f32 %v350, %v223
        %v352 = vadd.f32 %v351, %v224
        %v353 = vadd.f32 %v352, %v225
        %v354 = vadd.f32 %v353, %v226
        %v355 = vadd.f32 %v354, %v227
        %v356 = vadd.f32 %v355, %v228
        %v357 = vadd.f32 %v356, %v229
        %v358 = vadd.f32 %v357, %v230
        %v359 = vadd.f32 %v358, %v231
        %v360 = vadd.f32 %v359, %v232
        %v361 = vadd.f32 %v360, %v233
        %v362 = vadd.f32 %v361, %v234
        %v363 = vadd.f32 %v362, %v235
        %v364 = vadd.f32 %v363, %v236
        %v365 = vadd.f32 %v364, %v237
        %v366 = vadd.f32 %v365, %v238
        %v367 = vadd.f32 %v366, %v239
        %v368 = vadd.f32 %v367, %v240
        %v369 = vadd.f32 %v368, %v241
        %v370 = vadd.f32 %v369, %v242
        %v371 = vadd.f32 %v370, %v243
        %v372 = vadd.f32 %v371, %v244
        %v373 = vadd.f32 %v372, %v245
        %v374 = vadd.f32 %v373, %v246
        %v375 = vadd.f32 %v374, %v247
        %v376 = vadd.f32 %v375, %v248
        %v377 = vadd.f32 %v376, %v249
        %v378 = vadd.f32 %v377, %v250
        %v379 = vadd.f32 %v378, %v251
        %v380 = vadd.f32 %v379, %v252
        %v381 = vadd.f32 %v380, %v253
        %v382 = vadd.f32 %v381, %v254
        %v383 = vadd.f32 %v382, %v255
        %v384 = vadd.f32 %v383, %v256
        %v385 = vadd.f32 %v384, %v257
        %v386 = vadd.f32 %v385, %v258
        %v387 = vadd.f32 %v386, %v259
        %v388 = vadd.f32 %v387, %v260
        %v389 = vadd.f32 %v388, %v261
        %v390 = vadd.f32 %v389, %v262
        %v391 = vadd.f32 %v390, %v263
        %v392 = vadd.f32 %v391, %v264
        %v393 = vadd.f32 %v392, %v265
        %v394 = vadd.f32 %v393, %v266
        %v395 = vadd.f32 %v394, %v267
        %v396 = vadd.f32 %v395, %v268
        %v397 = vadd.f32 %v396, %v269
        %v398 = vadd.f32 %v397, %v270
        %v399 = vadd.f32 %v398, %v271
        %v400 = vadd.f32 %v399, %v272
        %v401 = vadd.f32 %v400, %v273
        %v402 = vadd.f32 %v401, %v274
        %v403 = vadd.f32 %v402, %v275
        %v404 = vadd.f32 %v403, %v276
        %v405 = vadd.f32 %v404, %v277
        %v406 = vadd.f32 %v405, %v278
        %v407 = vadd.f32 %v406, %v279
        %v408 = vadd.f32 %v407, %v280
        %v409 = vadd.f32 %v408, %v281
        %v410 = vadd.f32 %v409, %v282
        %v411 = vadd.f32 %v410, %v283
        %v412 = vadd.f32 %v411, %v284
        %v413 = vadd.f32 %v412, %v285
        %v414 = vadd.f32 %v413, %v286
        %v415 = vadd.f32 %v414, %v287
        %v416 = vadd.f32 %v415, %v288
        %v417 = vadd.f32 %v416, %v289
        %v418 = vadd.f32 %v417, %v290
        %v419 = vadd.f32 %v418, %v291
        %v420 = vadd.f32 %v419, %v292
        %v421 = vadd.f32 %v420, %v293
        %v422 = vadd.f32 %v421, %v294
        %v423 = vadd.f32 %v422, %v295
        %v424 = vadd.f32 %v423, %v296
        %v425 = vadd.f32 %v424, %v297
        %v426 = vadd.f32 %v425, %v298
        %v427 = vadd.f32 %v426, %v299
        %v428 = vadd.f32 %v427, %v300
        %v429 = vadd.f32 %v428, %v301
        %v430 = vadd.f32 %v429, %v302
        %v431 = vadd.f32 %v430, %v303
        %v432 = vadd.f32 %v431, %v304
        %v433 = vadd.f32 %v432, %v305
        %v434 = vadd.f32 %v433, %v306
        %v435 = vadd.f32 %v434, %v307
        %v436 = vadd.f32 %v435, %v308
        %v437 = vadd.f32 %v436, %v309
        %v438 = vadd.f32 %v437, %v310
        %v439 = vadd.f32 %v438, %v311
        %v440 = vadd.f32 %v439, %v312
        %v441 = vadd.f32 %v440, %v313
        %v442 = vadd.f32 %v441, %v314
        %v443 = vadd.f32 %v442, %v315
        %v444 = vadd.f32 %v443, %v316
        %v445 = vadd.f32 %v444, %v317
        %v446 = vadd.f32 %v445, %v318
        %v447 = vadd.f32 %v446, %v319
        %v448 = vadd.f32 %v447, %v320
        %v449 = vadd.f32 %v448, %v321
        %v450 = vadd.f32 %v449, %v322
        %v451 = vadd.f32 %v450, %v323
        %v452 = vrot.slane %v451, 4
        %v453 = vadd.f32 %v451, %v452
        %v454 = vrot.slane %v453, 2
        %v455 = vadd.f32 %v453, %v454
        %v456 = vrot.slane %v455, 1
        %v457 = vadd.f32 %v455, %v456
        %v458 = vadd.f32 %v324, %v457
        %459 = vst [vmem:[%s182] sm:$0x1] %v458
        %v460 = vld [vmem:[%s188] sm:$0x1]
        %v461 = vmul.f32 %v196, %v196
        %v462 = vmul.f32 %v197, %v197
        %v463 = vmul.f32 %v198, %v198
        %v464 = vmul.f32 %v199, %v199
        %v465 = vmul.f32 %v200, %v200
        %v466 = vmul.f32 %v201, %v201
        %v467 = vmul.f32 %v202, %v202
        %v468 = vmul.f32 %v203, %v203
        %v469 = vmul.f32 %v204, %v204
        %v470 = vmul.f32 %v205, %v205
        %v471 = vmul.f32 %v206, %v206
        %v472 = vmul.f32 %v207, %v207
        %v473 = vmul.f32 %v208, %v208
        %v474 = vmul.f32 %v209, %v209
        %v475 = vmul.f32 %v210, %v210
        %v476 = vmul.f32 %v211, %v211
        %v477 = vmul.f32 %v212, %v212
        %v478 = vmul.f32 %v213, %v213
        %v479 = vmul.f32 %v214, %v214
        %v480 = vmul.f32 %v215, %v215
        %v481 = vmul.f32 %v216, %v216
        %v482 = vmul.f32 %v217, %v217
        %v483 = vmul.f32 %v218, %v218
        %v484 = vmul.f32 %v219, %v219
        %v485 = vmul.f32 %v220, %v220
        %v486 = vmul.f32 %v221, %v221
        %v487 = vmul.f32 %v222, %v222
        %v488 = vmul.f32 %v223, %v223
        %v489 = vmul.f32 %v224, %v224
        %v490 = vmul.f32 %v225, %v225
        %v491 = vmul.f32 %v226, %v226
        %v492 = vmul.f32 %v227, %v227
        %v493 = vmul.f32 %v228, %v228
        %v494 = vmul.f32 %v229, %v229
        %v495 = vmul.f32 %v230, %v230
        %v496 = vmul.f32 %v231, %v231
        %v497 = vmul.f32 %v232, %v232
        %v498 = vmul.f32 %v233, %v233
        %v499 = vmul.f32 %v234, %v234
        %v500 = vmul.f32 %v235, %v235
        %v501 = vmul.f32 %v236, %v236
        %v502 = vmul.f32 %v237, %v237
        %v503 = vmul.f32 %v238, %v238
        %v504 = vmul.f32 %v239, %v239
        %v505 = vmul.f32 %v240, %v240
        %v506 = vmul.f32 %v241, %v241
        %v507 = vmul.f32 %v242, %v242
        %v508 = vmul.f32 %v243, %v243
        %v509 = vmul.f32 %v244, %v244
        %v510 = vmul.f32 %v245, %v245
        %v511 = vmul.f32 %v246, %v246
        %v512 = vmul.f32 %v247, %v247
        %v513 = vmul.f32 %v248, %v248
        %v514 = vmul.f32 %v249, %v249
        %v515 = vmul.f32 %v250, %v250
        %v516 = vmul.f32 %v251, %v251
        %v517 = vmul.f32 %v252, %v252
        %v518 = vmul.f32 %v253, %v253
        %v519 = vmul.f32 %v254, %v254
        %v520 = vmul.f32 %v255, %v255
        %v521 = vmul.f32 %v256, %v256
        %v522 = vmul.f32 %v257, %v257
        %v523 = vmul.f32 %v258, %v258
        %v524 = vmul.f32 %v259, %v259
        %v525 = vmul.f32 %v260, %v260
        %v526 = vmul.f32 %v261, %v261
        %v527 = vmul.f32 %v262, %v262
        %v528 = vmul.f32 %v263, %v263
        %v529 = vmul.f32 %v264, %v264
        %v530 = vmul.f32 %v265, %v265
        %v531 = vmul.f32 %v266, %v266
        %v532 = vmul.f32 %v267, %v267
        %v533 = vmul.f32 %v268, %v268
        %v534 = vmul.f32 %v269, %v269
        %v535 = vmul.f32 %v270, %v270
        %v536 = vmul.f32 %v271, %v271
        %v537 = vmul.f32 %v272, %v272
        %v538 = vmul.f32 %v273, %v273
        %v539 = vmul.f32 %v274, %v274
        %v540 = vmul.f32 %v275, %v275
        %v541 = vmul.f32 %v276, %v276
        %v542 = vmul.f32 %v277, %v277
        %v543 = vmul.f32 %v278, %v278
        %v544 = vmul.f32 %v279, %v279
        %v545 = vmul.f32 %v280, %v280
        %v546 = vmul.f32 %v281, %v281
        %v547 = vmul.f32 %v282, %v282
        %v548 = vmul.f32 %v283, %v283
        %v549 = vmul.f32 %v284, %v284
        %v550 = vmul.f32 %v285, %v285
        %v551 = vmul.f32 %v286, %v286
        %v552 = vmul.f32 %v287, %v287
        %v553 = vmul.f32 %v288, %v288
        %v554 = vmul.f32 %v289, %v289
        %v555 = vmul.f32 %v290, %v290
        %v556 = vmul.f32 %v291, %v291
        %v557 = vmul.f32 %v292, %v292
        %v558 = vmul.f32 %v293, %v293
        %v559 = vmul.f32 %v294, %v294
        %v560 = vmul.f32 %v295, %v295
        %v561 = vmul.f32 %v296, %v296
        %v562 = vmul.f32 %v297, %v297
        %v563 = vmul.f32 %v298, %v298
        %v564 = vmul.f32 %v299, %v299
        %v565 = vmul.f32 %v300, %v300
        %v566 = vmul.f32 %v301, %v301
        %v567 = vmul.f32 %v302, %v302
        %v568 = vmul.f32 %v303, %v303
        %v569 = vmul.f32 %v304, %v304
        %v570 = vmul.f32 %v305, %v305
        %v571 = vmul.f32 %v306, %v306
        %v572 = vmul.f32 %v307, %v307
        %v573 = vmul.f32 %v308, %v308
        %v574 = vmul.f32 %v309, %v309
        %v575 = vmul.f32 %v310, %v310
        %v576 = vmul.f32 %v311, %v311
        %v577 = vmul.f32 %v312, %v312
        %v578 = vmul.f32 %v313, %v313
        %v579 = vmul.f32 %v314, %v314
        %v580 = vmul.f32 %v315, %v315
        %v581 = vmul.f32 %v316, %v316
        %v582 = vmul.f32 %v317, %v317
        %v583 = vmul.f32 %v318, %v318
        %v584 = vmul.f32 %v319, %v319
        %v585 = vmul.f32 %v320, %v320
        %v586 = vmul.f32 %v321, %v321
        %v587 = vmul.f32 %v322, %v322
        %v588 = vmul.f32 %v323, %v323
        %v589 = vadd.f32 %v461, %v462
        %v590 = vadd.f32 %v589, %v463
        %v591 = vadd.f32 %v590, %v464
        %v592 = vadd.f32 %v591, %v465
        %v593 = vadd.f32 %v592, %v466
        %v594 = vadd.f32 %v593, %v467
        %v595 = vadd.f32 %v594, %v468
        %v596 = vadd.f32 %v595, %v469
        %v597 = vadd.f32 %v596, %v470
        %v598 = vadd.f32 %v597, %v471
        %v599 = vadd.f32 %v598, %v472
        %v600 = vadd.f32 %v599, %v473
        %v601 = vadd.f32 %v600, %v474
        %v602 = vadd.f32 %v601, %v475
        %v603 = vadd.f32 %v602, %v476
        %v604 = vadd.f32 %v603, %v477
        %v605 = vadd.f32 %v604, %v478
        %v606 = vadd.f32 %v605, %v479
        %v607 = vadd.f32 %v606, %v480
        %v608 = vadd.f32 %v607, %v481
        %v609 = vadd.f32 %v608, %v482
        %v610 = vadd.f32 %v609, %v483
        %v611 = vadd.f32 %v610, %v484
        %v612 = vadd.f32 %v611, %v485
        %v613 = vadd.f32 %v612, %v486
        %v614 = vadd.f32 %v613, %v487
        %v615 = vadd.f32 %v614, %v488
        %v616 = vadd.f32 %v615, %v489
        %v617 = vadd.f32 %v616, %v490
        %v618 = vadd.f32 %v617, %v491
        %v619 = vadd.f32 %v618, %v492
        %v620 = vadd.f32 %v619, %v493
        %v621 = vadd.f32 %v620, %v494
        %v622 = vadd.f32 %v621, %v495
        %v623 = vadd.f32 %v622, %v496
        %v624 = vadd.f32 %v623, %v497
        %v625 = vadd.f32 %v624, %v498
        %v626 = vadd.f32 %v625, %v499
        %v627 = vadd.f32 %v626, %v500
        %v628 = vadd.f32 %v627, %v501
        %v629 = vadd.f32 %v628, %v502
        %v630 = vadd.f32 %v629, %v503
        %v631 = vadd.f32 %v630, %v504
        %v632 = vadd.f32 %v631, %v505
        %v633 = vadd.f32 %v632, %v506
        %v634 = vadd.f32 %v633, %v507
        %v635 = vadd.f32 %v634, %v508
        %v636 = vadd.f32 %v635, %v509
        %v637 = vadd.f32 %v636, %v510
        %v638 = vadd.f32 %v637, %v511
        %v639 = vadd.f32 %v638, %v512
        %v640 = vadd.f32 %v639, %v513
        %v641 = vadd.f32 %v640, %v514
        %v642 = vadd.f32 %v641, %v515
        %v643 = vadd.f32 %v642, %v516
        %v644 = vadd.f32 %v643, %v517
        %v645 = vadd.f32 %v644, %v518
        %v646 = vadd.f32 %v645, %v519
        %v647 = vadd.f32 %v646, %v520
        %v648 = vadd.f32 %v647, %v521
        %v649 = vadd.f32 %v648, %v522
        %v650 = vadd.f32 %v649, %v523
        %v651 = vadd.f32 %v650, %v524
        %v652 = vadd.f32 %v651, %v525
        %v653 = vadd.f32 %v652, %v526
        %v654 = vadd.f32 %v653, %v527
        %v655 = vadd.f32 %v654, %v528
        %v656 = vadd.f32 %v655, %v529
        %v657 = vadd.f32 %v656, %v530
        %v658 = vadd.f32 %v657, %v531
        %v659 = vadd.f32 %v658, %v532
        %v660 = vadd.f32 %v659, %v533
        %v661 = vadd.f32 %v660, %v534
        %v662 = vadd.f32 %v661, %v535
        %v663 = vadd.f32 %v662, %v536
        %v664 = vadd.f32 %v663, %v537
        %v665 = vadd.f32 %v664, %v538
        %v666 = vadd.f32 %v665, %v539
        %v667 = vadd.f32 %v666, %v540
        %v668 = vadd.f32 %v667, %v541
        %v669 = vadd.f32 %v668, %v542
        %v670 = vadd.f32 %v669, %v543
        %v671 = vadd.f32 %v670, %v544
        %v672 = vadd.f32 %v671, %v545
        %v673 = vadd.f32 %v672, %v546
        %v674 = vadd.f32 %v673, %v547
        %v675 = vadd.f32 %v674, %v548
        %v676 = vadd.f32 %v675, %v549
        %v677 = vadd.f32 %v676, %v550
        %v678 = vadd.f32 %v677, %v551
        %v679 = vadd.f32 %v678, %v552
        %v680 = vadd.f32 %v679, %v553
        %v681 = vadd.f32 %v680, %v554
        %v682 = vadd.f32 %v681, %v555
        %v683 = vadd.f32 %v682, %v556
        %v684 = vadd.f32 %v683, %v557
        %v685 = vadd.f32 %v684, %v558
        %v686 = vadd.f32 %v685, %v559
        %v687 = vadd.f32 %v686, %v560
        %v688 = vadd.f32 %v687, %v561
        %v689 = vadd.f32 %v688, %v562
        %v690 = vadd.f32 %v689, %v563
        %v691 = vadd.f32 %v690, %v564
        %v692 = vadd.f32 %v691, %v565
        %v693 = vadd.f32 %v692, %v566
        %v694 = vadd.f32 %v693, %v567
        %v695 = vadd.f32 %v694, %v568
        %v696 = vadd.f32 %v695, %v569
        %v697 = vadd.f32 %v696, %v570
        %v698 = vadd.f32 %v697, %v571
        %v699 = vadd.f32 %v698, %v572
        %v700 = vadd.f32 %v699, %v573
        %v701 = vadd.f32 %v700, %v574
        %v702 = vadd.f32 %v701, %v575
        %v703 = vadd.f32 %v702, %v576
        %v704 = vadd.f32 %v703, %v577
        %v705 = vadd.f32 %v704, %v578
        %v706 = vadd.f32 %v705, %v579
        %v707 = vadd.f32 %v706, %v580
        %v708 = vadd.f32 %v707, %v581
        %v709 = vadd.f32 %v708, %v582
        %v710 = vadd.f32 %v709, %v583
        %v711 = vadd.f32 %v710, %v584
        %v712 = vadd.f32 %v711, %v585
        %v713 = vadd.f32 %v712, %v586
        %v714 = vadd.f32 %v713, %v587
        %v715 = vadd.f32 %v714, %v588
        %v716 = vrot.slane %v715, 4
        %v717 = vadd.f32 %v715, %v716
        %v718 = vrot.slane %v717, 2
        %v719 = vadd.f32 %v717, %v718
        %v720 = vrot.slane %v719, 1
        %v721 = vadd.f32 %v719, %v720
        %v722 = vadd.f32 %v460, %v721
        %723 = vst [vmem:[%s188] sm:$0x1] %v722
        // Predicated region
        $region33: #{tpu_custom_call.1} parent=23 // pred_check
          %p724 = pneg %p190
        $region34: #{tpu_custom_call.1} parent=23 // pred_check_branch
          %726 = sbr.rel (%p724) target = $region36
        $region35: #{tpu_custom_call.1} parent=23 // pred_region
          %v727 = vld [vmem:[%s182] sm:$0x1]
          %v728 = vmul.f32 %v727, 0.0009765625
          %v729 = vld [vmem:[%s188] sm:$0x1]
          %v730 = vmul.f32 %v729, 0.0009765625
          %v731 = vmul.f32 %v728, %v728
          %v732 = vsub.f32 %v730, %v731
          %733 = vst [vmem:[%s182] sm:$0x1] %v728
          %v734 = vadd.f32 %v732, 1e-05
          %v735 = vrsqrt.pop %v734
          %v736 = vmul.f32 %v735, %v734
          %v737 = vmul.f32 %v736, %v735
          %v738 = vmul.f32 0.5, %v737
          %v739 = vsub.f32 1.5, %v738
          %v740 = vmul.f32 %v735, %v739
          %vm741 = vweird.f32 %v734
          %vm742 = vweird.f32 %v735
          %vm743 = vmor %vm741, %vm742
          %v744 = vsel %vm743, %v735, %v740
          %745 = vst [vmem:[%s188] sm:$0x1] %v744
        $region36: #{tpu_custom_call.1} parent=23 // pred_fallthru
          _
        %s746 = sand.u32 %s71, 1
        %s747 = scalar_lea.sflag [#allocation4], %s746
        %s748 = sand.u32 %s71, 1
        %s749 = scalar_lea.vmem [#allocation5], %s748
        %s750 = sand.u32 %s97, 1
        %s751 = scalar_lea.sflag [#allocation7], %s750
        %s752 = sand.u32 %s97, 1
        %s753 = scalar_lea.vmem [#allocation6], %s752
        // Predicated region
        $region37: #{tpu_custom_call.1} parent=23 // pred_check
          %p754 = pneg %p81
        $region38: #{tpu_custom_call.1} parent=23 // pred_check_branch
          %756 = sbr.rel (%p754) target = $region40
        $region39: #{tpu_custom_call.1} parent=23 // pred_region
          %758 = vsyncadd %s747, 0
          %s759 = scalar_lea.hbm %s1, %s27
          %s761 = sshll.u32 %s749, 4
          %s762 = int_to_ptr.vmem [resolvable:$true] %s761
          %s763 = sshll.u32 %s759, 4
          %s764 = int_to_ptr.hbm [resolvable:$true] %s763
          %766 = dma.vmem_to_hbm [thread:$0]  %s762, 16, %s764, %s747
        $region40: #{tpu_custom_call.1} parent=23 // pred_fallthru
          _
        // Predicated region
        $region41: #{tpu_custom_call.1} parent=23 // pred_check
          %p767 = pneg %p107
        $region42: #{tpu_custom_call.1} parent=23 // pred_check_branch
          %769 = sbr.rel (%p767) target = $region44
        $region43: #{tpu_custom_call.1} parent=23 // pred_region
          %771 = vsyncadd %s751, 0
          %s772 = scalar_lea.hbm %s2, %s27
          %s774 = sshll.u32 %s753, 4
          %s775 = int_to_ptr.vmem [resolvable:$true] %s774
          %s776 = sshll.u32 %s772, 4
          %s777 = int_to_ptr.hbm [resolvable:$true] %s776
          %779 = dma.vmem_to_hbm [thread:$0]  %s775, 16, %s777, %s751
        $region44: #{tpu_custom_call.1} parent=23 // pred_fallthru
          _
      $region24: #{tpu_custom_call.1} parent=5 // pred_fallthru
        _
      %p780 = scmp.le.s32.totalorder 2, %s18
      // Predicated region
      $region45: #{tpu_custom_call.1} parent=5 // pred_check
        %p781 = pneg %p780
      $region46: #{tpu_custom_call.1} parent=5 // pred_check_branch
        %783 = sbr.rel (%p781) target = $region48
      $region47: #{tpu_custom_call.1} parent=5 // pred_region
        %s784 = ssub.s32 %s18, 2
        // Predicated region
        $region49: #{tpu_custom_call.1} parent=47 // pred_check
          %p785 = pneg %p87
        $region50: #{tpu_custom_call.1} parent=47 // pred_check_branch
          %787 = sbr.rel (%p785) target = $region52
        $region51: #{tpu_custom_call.1} parent=47 // pred_region
          %s788 = sand.u32 %s72, 1
          %s789 = scalar_lea.sflag [#allocation4], %s788
          %s790 = sand.u32 %s72, 1
          %s791 = scalar_lea.vmem [#allocation5], %s790
          %793 = dma.done %s789, 16
        $region52: #{tpu_custom_call.1} parent=47 // pred_fallthru
          _
        // Predicated region
        $region53: #{tpu_custom_call.1} parent=47 // pred_check
          %p794 = pneg %p113
        $region54: #{tpu_custom_call.1} parent=47 // pred_check_branch
          %796 = sbr.rel (%p794) target = $region56
        $region55: #{tpu_custom_call.1} parent=47 // pred_region
          %s797 = sand.u32 %s98, 1
          %s798 = scalar_lea.sflag [#allocation7], %s797
          %s799 = sand.u32 %s98, 1
          %s800 = scalar_lea.vmem [#allocation6], %s799
          %802 = dma.done %s798, 16
        $region56: #{tpu_custom_call.1} parent=47 // pred_fallthru
          _
      $region48: #{tpu_custom_call.1} parent=5 // pred_fallthru
        _
    $region6: #{tpu_custom_call.1} parent=1 // loop_footer
      %s22 = sadd.s32 1, %s18
    $region7: #{tpu_custom_call.1} parent=1 // loop_footer_branch
      %17 = sbr.rel target = $region3
    $region8: #{tpu_custom_call.1} parent=1 // loop_exit
      _
    %803 = vsyncpa [#allocation3], 1
    %s804 = scalar_lea.sflag [#allocation3], 1
    %805 = vsyncpa %s804, 1
    %806 = vsyncpa [#allocation4], 1
    %s807 = scalar_lea.sflag [#allocation4], 1
    %808 = vsyncpa %s807, 1
    %809 = vsyncpa [#allocation7], 1
    %s810 = scalar_lea.sflag [#allocation7], 1
    %811 = vsyncpa %s810, 1

</llo_original>
